<compile_context>
chip_gen: v7x
topology: tpu7x:2x2x1
jax: 0.10.0
libtpu: 0.0.40
codegen_flags: <defaults>
</compile_context>

<pallas_src>
import jax
import jax.numpy as jnp
from jax import lax
from jax.experimental import pallas as pl
from jax.experimental.pallas import tpu as pltpu

OUT_CLASSES = 11
OUT_PAD = 128      # lane-dense output width
HIDDEN = 64
HIDDEN_PAD = 128   # lane-dense hidden width

# Combined table bytes below which the tables are kept VMEM-resident.
# Conservative for v7x (64 MiB physical VMEM, 32 MiB scoped default) and
# accounts for Pallas allocating 2 buffers per input BlockSpec.
RESIDENT_TABLE_BYTES_MAX = 8 * 1024 * 1024


def _round_up(x, m):
    return (x + m - 1) // m * m


def _mlp(ubuf, ibuf, w1u_ref, w1i_ref, b1_ref, w2_ref, b2_ref, out_ref):
    """fc1(+ReLU) in split-w1 form (no concat) and fc2, lane-dense padded."""
    h = (jnp.dot(ubuf[...], w1u_ref[...], preferred_element_type=jnp.float32)
         + jnp.dot(ibuf[...], w1i_ref[...], preferred_element_type=jnp.float32)
         + b1_ref[...])
    h = jnp.maximum(h, 0.0)
    out_ref[...] = (jnp.dot(h, w2_ref[...], preferred_element_type=jnp.float32)
                    + b2_ref[...])


def _kernel_vmem_tables(uid_ref, iid_ref,            # (1,1,TB) int32, SMEM per tile
                        uemb_ref, iemb_ref,          # full tables, VMEM-resident
                        w1u_ref, w1i_ref, b1_ref, w2_ref, b2_ref,
                        out_ref,                     # (TB, OUT_PAD)
                        ubuf, ibuf):                 # (TB, D) f32 scratch
    TB = ubuf.shape[0]

    # In-VMEM gather: one dynamic row read + row store per batch element.
    # Unrolled so scalar index reads co-issue with the vector loads/stores.
    def gather(r, carry):
        u = uid_ref[0, 0, r]
        i = iid_ref[0, 0, r]
        ubuf[pl.ds(r, 1), :] = uemb_ref[pl.ds(u, 1), :]
        ibuf[pl.ds(r, 1), :] = iemb_ref[pl.ds(i, 1), :]
        return carry

    lax.fori_loop(0, TB, gather, 0, unroll=8)

    _mlp(ubuf, ibuf, w1u_ref, w1i_ref, b1_ref, w2_ref, b2_ref, out_ref)


def _kernel_hbm_tables(uid_ref, iid_ref,             # (1,1,TB) int32, SMEM per tile
                       uemb_hbm, iemb_hbm,           # tables stay in HBM
                       w1u_ref, w1i_ref, b1_ref, w2_ref, b2_ref,
                       out_ref,
                       ubuf, ibuf, usem, isem):      # scratch + 1 sem per table
    TB = ubuf.shape[0]

    # Issue all row DMAs (both tables) against a single semaphore per table.
    def issue(r, carry):
        u = uid_ref[0, 0, r]
        i = iid_ref[0, 0, r]
        pltpu.make_async_copy(uemb_hbm.at[pl.ds(u, 1), :],
                              ubuf.at[pl.ds(r, 1), :], usem).start()
        pltpu.make_async_copy(iemb_hbm.at[pl.ds(i, 1), :],
                              ibuf.at[pl.ds(r, 1), :], isem).start()
        return carry

    lax.fori_loop(0, TB, issue, 0, unroll=8)

    # Single aggregated wait per table: every row copy signals the same
    # semaphore by its byte count, and a descriptor spanning the whole (TB, D)
    # buffer waits for exactly TB * D * 4 bytes == the sum of the TB row
    # transfers.  Using ubuf/ibuf as both src and dst keeps the byte count
    # self-evidently correct (no dummy table slice).
    pltpu.make_async_copy(ubuf, ubuf, usem).wait()
    pltpu.make_async_copy(ibuf, ibuf, isem).wait()

    # TODO(synk): double-buffer ubuf/ibuf and prefetch tile t+1 here to hide
    # the HBM gather latency behind this tile's matmuls.
    _mlp(ubuf, ibuf, w1u_ref, w1i_ref, b1_ref, w2_ref, b2_ref, out_ref)


def rating_classifier_forward(user_ids, item_ids, params, *, batch_tile=None):
    """user_ids, item_ids: int [B]. Returns f32 [B, 11] logits."""
    uemb = params["user_emb"].astype(jnp.float32)
    iemb = params["item_emb"].astype(jnp.float32)
    w1 = params["w1"].astype(jnp.float32)
    b1 = params["b1"].astype(jnp.float32)
    w2 = params["w2"].astype(jnp.float32)
    b2 = params["b2"].astype(jnp.float32)

    U, D = uemb.shape
    I = iemb.shape[0]
    H = w1.shape[1]
    O = w2.shape[1]
    B = user_ids.shape[0]

    # Batch tile: large tiles amortize the ~0.35us/grid-step overhead and fill
    # the MXU better; target >= 2 tiles when the batch allows it so v7x's two
    # TensorCores both get a slice of the "parallel" batch axis.
    if batch_tile is None:
        batch_tile = max(8, min(1024, _round_up(-(-B // 2), 8)))
    TB = _round_up(batch_tile, 8)
    Bp = _round_up(B, TB)
    n_tiles = Bp // TB

    # Clamp ids (PyTorch would raise on out-of-range; TPU has no bounds check),
    # pad the batch with id 0 (padded rows sliced away), and reshape to one
    # small SMEM block per grid tile -> SMEM usage stays O(TB), not O(B).
    uid = jnp.clip(user_ids.astype(jnp.int32), 0, U - 1)
    iid = jnp.clip(item_ids.astype(jnp.int32), 0, I - 1)
    uid = jnp.pad(uid, (0, Bp - B)).reshape(n_tiles, 1, TB)
    iid = jnp.pad(iid, (0, Bp - B)).reshape(n_tiles, 1, TB)

    # Split w1 (no concat in-kernel) and zero-pad hidden/output to 128 lanes.
    w1u, w1i = w1[:D], w1[D:]
    Hp, Op = HIDDEN_PAD, OUT_PAD
    w1u_p = jnp.zeros((D, Hp), jnp.float32).at[:, :H].set(w1u)
    w1i_p = jnp.zeros((D, Hp), jnp.float32).at[:, :H].set(w1i)
    b1_p = jnp.zeros((1, Hp), jnp.float32).at[:, :H].set(b1)
    w2_p = jnp.zeros((Hp, Op), jnp.float32).at[:H, :O].set(w2)
    b2_p = jnp.zeros((1, Op), jnp.float32).at[:, :O].set(b2)

    table_bytes = (U + I) * D * jnp.dtype(jnp.float32).itemsize
    resident = table_bytes <= RESIDENT_TABLE_BYTES_MAX

    id_spec = pl.BlockSpec((1, 1, TB), lambda t: (t, 0, 0),
                           memory_space=pltpu.MemorySpace.SMEM)
    weight_specs = [
        pl.BlockSpec((D, Hp), lambda t: (0, 0)),   # w1_user (VMEM-resident)
        pl.BlockSpec((D, Hp), lambda t: (0, 0)),   # w1_item
        pl.BlockSpec((1, Hp), lambda t: (0, 0)),   # b1
        pl.BlockSpec((Hp, Op), lambda t: (0, 0)),  # w2
        pl.BlockSpec((1, Op), lambda t: (0, 0)),   # b2
    ]
    out_spec = pl.BlockSpec((TB, Op), lambda t: (t, 0))

    if resident:
        kernel = _kernel_vmem_tables
        table_specs = [
            pl.BlockSpec((U, D), lambda t: (0, 0)),   # user table, VMEM-resident
            pl.BlockSpec((I, D), lambda t: (0, 0)),   # item table, VMEM-resident
        ]
        scratch = [
            pltpu.VMEM((TB, D), jnp.float32),         # gathered user rows
            pltpu.VMEM((TB, D), jnp.float32),         # gathered item rows
        ]
    else:
        kernel = _kernel_hbm_tables
        table_specs = [
            pl.BlockSpec(memory_space=pl.ANY),        # user table stays in HBM
            pl.BlockSpec(memory_space=pl.ANY),        # item table stays in HBM
        ]
        scratch = [
            pltpu.VMEM((TB, D), jnp.float32),
            pltpu.VMEM((TB, D), jnp.float32),
            pltpu.SemaphoreType.DMA(()),              # ONE sem per table
            pltpu.SemaphoreType.DMA(()),
        ]

    out_padded = pl.pallas_call(
        kernel,
        out_shape=jax.ShapeDtypeStruct((Bp, Op), jnp.float32),
        grid=(n_tiles,),
        in_specs=[id_spec, id_spec] + table_specs + weight_specs,
        out_specs=out_spec,
        scratch_shapes=scratch,
        compiler_params=pltpu.CompilerParams(
            dimension_semantics=("parallel",),        # shard batch tiles (v7x: 2 TCs)
            vmem_limit_bytes=32 * 1024 * 1024,        # v7x-safe (64 MiB physical)
        ),
    )(uid, iid, uemb, iemb, w1u_p, w1i_p, b1_p, w2_p, b2_p)

    return out_padded[:B, :OUT_CLASSES]


def init_params(num_users, num_items, embedding_dim=32, key=None):
    if key is None:
        key = jax.random.PRNGKey(0)
    k = jax.random.split(key, 6)
    return {
        "user_emb": jax.random.normal(k[0], (num_users, embedding_dim), jnp.float32),
        "item_emb": jax.random.normal(k[1], (num_items, embedding_dim), jnp.float32),
        # Stored as (in, out): transpose of PyTorch nn.Linear's (out, in).
        "w1": jax.random.normal(k[2], (embedding_dim * 2, HIDDEN), jnp.float32) * 0.1,
        "b1": jax.random.normal(k[3], (1, HIDDEN), jnp.float32) * 0.1,
        "w2": jax.random.normal(k[4], (HIDDEN, OUT_CLASSES), jnp.float32) * 0.1,
        "b2": jax.random.normal(k[5], (1, OUT_CLASSES), jnp.float32) * 0.1,
    }


def _reference_forward(user_ids, item_ids, params):
    uvec = params["user_emb"][user_ids]
    ivec = params["item_emb"][item_ids]
    x = jnp.concatenate([uvec, ivec], axis=-1)
    h = jnp.maximum(x @ params["w1"] + params["b1"], 0.0)
    return h @ params["w2"] + params["b2"]


if __name__ == "__main__":
    num_users, num_items, embedding_dim = 16, 24, 32
    batch = 8

    key = jax.random.PRNGKey(0)
    kp, ku, ki = jax.random.split(key, 3)

    params = init_params(num_users, num_items, embedding_dim, key=kp)
    user_ids = jax.random.randint(ku, (batch,), 0, num_users, dtype=jnp.int32)
    item_ids = jax.random.randint(ki, (batch,), 0, num_items, dtype=jnp.int32)

    logits = rating_classifier_forward(user_ids, item_ids, params)
    jax.block_until_ready(logits)

    ref = _reference_forward(user_ids, item_ids, params)
    assert logits.shape == (batch, OUT_CLASSES)
    assert jnp.allclose(logits, ref, atol=1e-4, rtol=1e-4), "mismatch vs reference"

    print("KERNEL_OK")
</pallas_src>

<mosaic_0001>
module attributes {stable_mosaic.version = 11 : i64} {
  func.func @_kernel_vmem_tables(%arg0: i32, %arg1: memref<1x1x8xi32, #tpu.memory_space<smem>>, %arg2: memref<1x1x8xi32, #tpu.memory_space<smem>>, %arg3: memref<16x32xf32, #tpu.memory_space<vmem>>, %arg4: memref<24x32xf32, #tpu.memory_space<vmem>>, %arg5: memref<32x128xf32, #tpu.memory_space<vmem>>, %arg6: memref<32x128xf32, #tpu.memory_space<vmem>>, %arg7: memref<1x128xf32, #tpu.memory_space<vmem>>, %arg8: memref<128x128xf32, #tpu.memory_space<vmem>>, %arg9: memref<1x128xf32, #tpu.memory_space<vmem>>, %arg10: memref<8x128xf32, #tpu.memory_space<vmem>>, %arg11: memref<8x32xf32, #tpu.memory_space<vmem>>, %arg12: memref<8x32xf32, #tpu.memory_space<vmem>>) attributes {dimension_semantics = [#tpu.dimension_semantics<parallel>], iteration_bounds = array<i64: 1>, scalar_prefetch = 0 : i64, scratch_operands = 2 : i64, tpu.core_type = #tpu.core_type<tc>, window_params = [{transform_indices = @transform_0, window_bounds = array<i64: 1, 1, 8>}, {transform_indices = @transform_1, window_bounds = array<i64: 1, 1, 8>}, {pipeline_mode = #tpu.pipeline_mode<synchronous>, transform_indices = @transform_2, window_bounds = array<i64: 16, 32>}, {pipeline_mode = #tpu.pipeline_mode<synchronous>, transform_indices = @transform_3, window_bounds = array<i64: 24, 32>}, {pipeline_mode = #tpu.pipeline_mode<synchronous>, transform_indices = @transform_4, window_bounds = array<i64: 32, 128>}, {pipeline_mode = #tpu.pipeline_mode<synchronous>, transform_indices = @transform_5, window_bounds = array<i64: 32, 128>}, {pipeline_mode = #tpu.pipeline_mode<synchronous>, transform_indices = @transform_6, window_bounds = array<i64: 1, 128>}, {pipeline_mode = #tpu.pipeline_mode<synchronous>, transform_indices = @transform_7, window_bounds = array<i64: 128, 128>}, {pipeline_mode = #tpu.pipeline_mode<synchronous>, transform_indices = @transform_8, window_bounds = array<i64: 1, 128>}, {transform_indices = @transform_9, window_bounds = array<i64: 8, 128>}]} {
    %c0_i32 = arith.constant 0 : i32
    %c0 = arith.constant 0 : index
    %c0_0 = arith.constant 0 : index
    %0 = arith.index_cast %c0_i32 : i32 to index
    %1 = memref.load %arg1[%c0, %c0_0, %0] : memref<1x1x8xi32, #tpu.memory_space<smem>>
    %c0_1 = arith.constant 0 : index
    %c0_2 = arith.constant 0 : index
    %2 = arith.index_cast %c0_i32 : i32 to index
    %3 = memref.load %arg2[%c0_1, %c0_2, %2] : memref<1x1x8xi32, #tpu.memory_space<smem>>
    %4 = arith.index_cast %1 : i32 to index
    %c0_3 = arith.constant 0 : index
    %5 = vector.load %arg3[%4, %c0_3] : memref<16x32xf32, #tpu.memory_space<vmem>>, vector<1x32xf32>
    %6 = arith.index_cast %c0_i32 : i32 to index
    %c0_4 = arith.constant 0 : index
    %7 = vector.load %arg11[%6, %c0_4] : memref<8x32xf32, #tpu.memory_space<vmem>>, vector<1x32xf32>
    tpu.vector_store %arg11[%6, %c0_4], %5 {strides = array<i32>} : memref<8x32xf32, #tpu.memory_space<vmem>>, vector<1x32xf32>,
    %8 = arith.index_cast %3 : i32 to index
    %c0_5 = arith.constant 0 : index
    %9 = vector.load %arg4[%8, %c0_5] : memref<24x32xf32, #tpu.memory_space<vmem>>, vector<1x32xf32>
    %10 = arith.index_cast %c0_i32 : i32 to index
    %c0_6 = arith.constant 0 : index
    %11 = vector.load %arg12[%10, %c0_6] : memref<8x32xf32, #tpu.memory_space<vmem>>, vector<1x32xf32>
    tpu.vector_store %arg12[%10, %c0_6], %9 {strides = array<i32>} : memref<8x32xf32, #tpu.memory_space<vmem>>, vector<1x32xf32>,
    %c1_i32 = arith.constant 1 : i32
    %c0_7 = arith.constant 0 : index
    %c0_8 = arith.constant 0 : index
    %12 = arith.index_cast %c1_i32 : i32 to index
    %13 = memref.load %arg1[%c0_7, %c0_8, %12] : memref<1x1x8xi32, #tpu.memory_space<smem>>
    %c0_9 = arith.constant 0 : index
    %c0_10 = arith.constant 0 : index
    %14 = arith.index_cast %c1_i32 : i32 to index
    %15 = memref.load %arg2[%c0_9, %c0_10, %14] : memref<1x1x8xi32, #tpu.memory_space<smem>>
    %16 = arith.index_cast %13 : i32 to index
    %c0_11 = arith.constant 0 : index
    %17 = vector.load %arg3[%16, %c0_11] : memref<16x32xf32, #tpu.memory_space<vmem>>, vector<1x32xf32>
    %18 = arith.index_cast %c1_i32 : i32 to index
    %c0_12 = arith.constant 0 : index
    %19 = vector.load %arg11[%18, %c0_12] : memref<8x32xf32, #tpu.memory_space<vmem>>, vector<1x32xf32>
    tpu.vector_store %arg11[%18, %c0_12], %17 {strides = array<i32>} : memref<8x32xf32, #tpu.memory_space<vmem>>, vector<1x32xf32>,
    %20 = arith.index_cast %15 : i32 to index
    %c0_13 = arith.constant 0 : index
    %21 = vector.load %arg4[%20, %c0_13] : memref<24x32xf32, #tpu.memory_space<vmem>>, vector<1x32xf32>
    %22 = arith.index_cast %c1_i32 : i32 to index
    %c0_14 = arith.constant 0 : index
    %23 = vector.load %arg12[%22, %c0_14] : memref<8x32xf32, #tpu.memory_space<vmem>>, vector<1x32xf32>
    tpu.vector_store %arg12[%22, %c0_14], %21 {strides = array<i32>} : memref<8x32xf32, #tpu.memory_space<vmem>>, vector<1x32xf32>,
    %c2_i32 = arith.constant 2 : i32
    %c0_15 = arith.constant 0 : index
    %c0_16 = arith.constant 0 : index
    %24 = arith.index_cast %c2_i32 : i32 to index
    %25 = memref.load %arg1[%c0_15, %c0_16, %24] : memref<1x1x8xi32, #tpu.memory_space<smem>>
    %c0_17 = arith.constant 0 : index
    %c0_18 = arith.constant 0 : index
    %26 = arith.index_cast %c2_i32 : i32 to index
    %27 = memref.load %arg2[%c0_17, %c0_18, %26] : memref<1x1x8xi32, #tpu.memory_space<smem>>
    %28 = arith.index_cast %25 : i32 to index
    %c0_19 = arith.constant 0 : index
    %29 = vector.load %arg3[%28, %c0_19] : memref<16x32xf32, #tpu.memory_space<vmem>>, vector<1x32xf32>
    %30 = arith.index_cast %c2_i32 : i32 to index
    %c0_20 = arith.constant 0 : index
    %31 = vector.load %arg11[%30, %c0_20] : memref<8x32xf32, #tpu.memory_space<vmem>>, vector<1x32xf32>
    tpu.vector_store %arg11[%30, %c0_20], %29 {strides = array<i32>} : memref<8x32xf32, #tpu.memory_space<vmem>>, vector<1x32xf32>,
    %32 = arith.index_cast %27 : i32 to index
    %c0_21 = arith.constant 0 : index
    %33 = vector.load %arg4[%32, %c0_21] : memref<24x32xf32, #tpu.memory_space<vmem>>, vector<1x32xf32>
    %34 = arith.index_cast %c2_i32 : i32 to index
    %c0_22 = arith.constant 0 : index
    %35 = vector.load %arg12[%34, %c0_22] : memref<8x32xf32, #tpu.memory_space<vmem>>, vector<1x32xf32>
    tpu.vector_store %arg12[%34, %c0_22], %33 {strides = array<i32>} : memref<8x32xf32, #tpu.memory_space<vmem>>, vector<1x32xf32>,
    %c3_i32 = arith.constant 3 : i32
    %c0_23 = arith.constant 0 : index
    %c0_24 = arith.constant 0 : index
    %36 = arith.index_cast %c3_i32 : i32 to index
    %37 = memref.load %arg1[%c0_23, %c0_24, %36] : memref<1x1x8xi32, #tpu.memory_space<smem>>
    %c0_25 = arith.constant 0 : index
    %c0_26 = arith.constant 0 : index
    %38 = arith.index_cast %c3_i32 : i32 to index
    %39 = memref.load %arg2[%c0_25, %c0_26, %38] : memref<1x1x8xi32, #tpu.memory_space<smem>>
    %40 = arith.index_cast %37 : i32 to index
    %c0_27 = arith.constant 0 : index
    %41 = vector.load %arg3[%40, %c0_27] : memref<16x32xf32, #tpu.memory_space<vmem>>, vector<1x32xf32>
    %42 = arith.index_cast %c3_i32 : i32 to index
    %c0_28 = arith.constant 0 : index
    %43 = vector.load %arg11[%42, %c0_28] : memref<8x32xf32, #tpu.memory_space<vmem>>, vector<1x32xf32>
    tpu.vector_store %arg11[%42, %c0_28], %41 {strides = array<i32>} : memref<8x32xf32, #tpu.memory_space<vmem>>, vector<1x32xf32>,
    %44 = arith.index_cast %39 : i32 to index
    %c0_29 = arith.constant 0 : index
    %45 = vector.load %arg4[%44, %c0_29] : memref<24x32xf32, #tpu.memory_space<vmem>>, vector<1x32xf32>
    %46 = arith.index_cast %c3_i32 : i32 to index
    %c0_30 = arith.constant 0 : index
    %47 = vector.load %arg12[%46, %c0_30] : memref<8x32xf32, #tpu.memory_space<vmem>>, vector<1x32xf32>
    tpu.vector_store %arg12[%46, %c0_30], %45 {strides = array<i32>} : memref<8x32xf32, #tpu.memory_space<vmem>>, vector<1x32xf32>,
    %c4_i32 = arith.constant 4 : i32
    %c0_31 = arith.constant 0 : index
    %c0_32 = arith.constant 0 : index
    %48 = arith.index_cast %c4_i32 : i32 to index
    %49 = memref.load %arg1[%c0_31, %c0_32, %48] : memref<1x1x8xi32, #tpu.memory_space<smem>>
    %c0_33 = arith.constant 0 : index
    %c0_34 = arith.constant 0 : index
    %50 = arith.index_cast %c4_i32 : i32 to index
    %51 = memref.load %arg2[%c0_33, %c0_34, %50] : memref<1x1x8xi32, #tpu.memory_space<smem>>
    %52 = arith.index_cast %49 : i32 to index
    %c0_35 = arith.constant 0 : index
    %53 = vector.load %arg3[%52, %c0_35] : memref<16x32xf32, #tpu.memory_space<vmem>>, vector<1x32xf32>
    %54 = arith.index_cast %c4_i32 : i32 to index
    %c0_36 = arith.constant 0 : index
    %55 = vector.load %arg11[%54, %c0_36] : memref<8x32xf32, #tpu.memory_space<vmem>>, vector<1x32xf32>
    tpu.vector_store %arg11[%54, %c0_36], %53 {strides = array<i32>} : memref<8x32xf32, #tpu.memory_space<vmem>>, vector<1x32xf32>,
    %56 = arith.index_cast %51 : i32 to index
    %c0_37 = arith.constant 0 : index
    %57 = vector.load %arg4[%56, %c0_37] : memref<24x32xf32, #tpu.memory_space<vmem>>, vector<1x32xf32>
    %58 = arith.index_cast %c4_i32 : i32 to index
    %c0_38 = arith.constant 0 : index
    %59 = vector.load %arg12[%58, %c0_38] : memref<8x32xf32, #tpu.memory_space<vmem>>, vector<1x32xf32>
    tpu.vector_store %arg12[%58, %c0_38], %57 {strides = array<i32>} : memref<8x32xf32, #tpu.memory_space<vmem>>, vector<1x32xf32>,
    %c5_i32 = arith.constant 5 : i32
    %c0_39 = arith.constant 0 : index
    %c0_40 = arith.constant 0 : index
    %60 = arith.index_cast %c5_i32 : i32 to index
    %61 = memref.load %arg1[%c0_39, %c0_40, %60] : memref<1x1x8xi32, #tpu.memory_space<smem>>
    %c0_41 = arith.constant 0 : index
    %c0_42 = arith.constant 0 : index
    %62 = arith.index_cast %c5_i32 : i32 to index
    %63 = memref.load %arg2[%c0_41, %c0_42, %62] : memref<1x1x8xi32, #tpu.memory_space<smem>>
    %64 = arith.index_cast %61 : i32 to index
    %c0_43 = arith.constant 0 : index
    %65 = vector.load %arg3[%64, %c0_43] : memref<16x32xf32, #tpu.memory_space<vmem>>, vector<1x32xf32>
    %66 = arith.index_cast %c5_i32 : i32 to index
    %c0_44 = arith.constant 0 : index
    %67 = vector.load %arg11[%66, %c0_44] : memref<8x32xf32, #tpu.memory_space<vmem>>, vector<1x32xf32>
    tpu.vector_store %arg11[%66, %c0_44], %65 {strides = array<i32>} : memref<8x32xf32, #tpu.memory_space<vmem>>, vector<1x32xf32>,
    %68 = arith.index_cast %63 : i32 to index
    %c0_45 = arith.constant 0 : index
    %69 = vector.load %arg4[%68, %c0_45] : memref<24x32xf32, #tpu.memory_space<vmem>>, vector<1x32xf32>
    %70 = arith.index_cast %c5_i32 : i32 to index
    %c0_46 = arith.constant 0 : index
    %71 = vector.load %arg12[%70, %c0_46] : memref<8x32xf32, #tpu.memory_space<vmem>>, vector<1x32xf32>
    tpu.vector_store %arg12[%70, %c0_46], %69 {strides = array<i32>} : memref<8x32xf32, #tpu.memory_space<vmem>>, vector<1x32xf32>,
    %c6_i32 = arith.constant 6 : i32
    %c0_47 = arith.constant 0 : index
    %c0_48 = arith.constant 0 : index
    %72 = arith.index_cast %c6_i32 : i32 to index
    %73 = memref.load %arg1[%c0_47, %c0_48, %72] : memref<1x1x8xi32, #tpu.memory_space<smem>>
    %c0_49 = arith.constant 0 : index
    %c0_50 = arith.constant 0 : index
    %74 = arith.index_cast %c6_i32 : i32 to index
    %75 = memref.load %arg2[%c0_49, %c0_50, %74] : memref<1x1x8xi32, #tpu.memory_space<smem>>
    %76 = arith.index_cast %73 : i32 to index
    %c0_51 = arith.constant 0 : index
    %77 = vector.load %arg3[%76, %c0_51] : memref<16x32xf32, #tpu.memory_space<vmem>>, vector<1x32xf32>
    %78 = arith.index_cast %c6_i32 : i32 to index
    %c0_52 = arith.constant 0 : index
    %79 = vector.load %arg11[%78, %c0_52] : memref<8x32xf32, #tpu.memory_space<vmem>>, vector<1x32xf32>
    tpu.vector_store %arg11[%78, %c0_52], %77 {strides = array<i32>} : memref<8x32xf32, #tpu.memory_space<vmem>>, vector<1x32xf32>,
    %80 = arith.index_cast %75 : i32 to index
    %c0_53 = arith.constant 0 : index
    %81 = vector.load %arg4[%80, %c0_53] : memref<24x32xf32, #tpu.memory_space<vmem>>, vector<1x32xf32>
    %82 = arith.index_cast %c6_i32 : i32 to index
    %c0_54 = arith.constant 0 : index
    %83 = vector.load %arg12[%82, %c0_54] : memref<8x32xf32, #tpu.memory_space<vmem>>, vector<1x32xf32>
    tpu.vector_store %arg12[%82, %c0_54], %81 {strides = array<i32>} : memref<8x32xf32, #tpu.memory_space<vmem>>, vector<1x32xf32>,
    %c7_i32 = arith.constant 7 : i32
    %c0_55 = arith.constant 0 : index
    %c0_56 = arith.constant 0 : index
    %84 = arith.index_cast %c7_i32 : i32 to index
    %85 = memref.load %arg1[%c0_55, %c0_56, %84] : memref<1x1x8xi32, #tpu.memory_space<smem>>
    %c0_57 = arith.constant 0 : index
    %c0_58 = arith.constant 0 : index
    %86 = arith.index_cast %c7_i32 : i32 to index
    %87 = memref.load %arg2[%c0_57, %c0_58, %86] : memref<1x1x8xi32, #tpu.memory_space<smem>>
    %88 = arith.index_cast %85 : i32 to index
    %c0_59 = arith.constant 0 : index
    %89 = vector.load %arg3[%88, %c0_59] : memref<16x32xf32, #tpu.memory_space<vmem>>, vector<1x32xf32>
    %90 = arith.index_cast %c7_i32 : i32 to index
    %c0_60 = arith.constant 0 : index
    %91 = vector.load %arg11[%90, %c0_60] : memref<8x32xf32, #tpu.memory_space<vmem>>, vector<1x32xf32>
    tpu.vector_store %arg11[%90, %c0_60], %89 {strides = array<i32>} : memref<8x32xf32, #tpu.memory_space<vmem>>, vector<1x32xf32>,
    %92 = arith.index_cast %87 : i32 to index
    %c0_61 = arith.constant 0 : index
    %93 = vector.load %arg4[%92, %c0_61] : memref<24x32xf32, #tpu.memory_space<vmem>>, vector<1x32xf32>
    %94 = arith.index_cast %c7_i32 : i32 to index
    %c0_62 = arith.constant 0 : index
    %95 = vector.load %arg12[%94, %c0_62] : memref<8x32xf32, #tpu.memory_space<vmem>>, vector<1x32xf32>
    tpu.vector_store %arg12[%94, %c0_62], %93 {strides = array<i32>} : memref<8x32xf32, #tpu.memory_space<vmem>>, vector<1x32xf32>,
    %c8_i32 = arith.constant 8 : i32
    %c0_63 = arith.constant 0 : index
    %c0_64 = arith.constant 0 : index
    %96 = vector.load %arg11[%c0_63, %c0_64] : memref<8x32xf32, #tpu.memory_space<vmem>>, vector<8x32xf32>
    %c0_65 = arith.constant 0 : index
    %c0_66 = arith.constant 0 : index
    %97 = vector.load %arg5[%c0_65, %c0_66] : memref<32x128xf32, #tpu.memory_space<vmem>>, vector<32x128xf32>
    %cst = arith.constant dense<0.000000e+00> : vector<8x128xf32>
    %98 = tpu.matmul %96, %97, %cst {dimension_numbers = #tpu.dot_dimension_numbers<[1], [0], [0], [1], [0, 0, 1, 1], [], []>} : vector<8x32xf32>, vector<32x128xf32>, vector<8x128xf32> -> vector<8x128xf32>
    %c0_67 = arith.constant 0 : index
    %c0_68 = arith.constant 0 : index
    %99 = vector.load %arg12[%c0_67, %c0_68] : memref<8x32xf32, #tpu.memory_space<vmem>>, vector<8x32xf32>
    %c0_69 = arith.constant 0 : index
    %c0_70 = arith.constant 0 : index
    %100 = vector.load %arg6[%c0_69, %c0_70] : memref<32x128xf32, #tpu.memory_space<vmem>>, vector<32x128xf32>
    %cst_71 = arith.constant dense<0.000000e+00> : vector<8x128xf32>
    %101 = tpu.matmul %99, %100, %cst_71 {dimension_numbers = #tpu.dot_dimension_numbers<[1], [0], [0], [1], [0, 0, 1, 1], [], []>} : vector<8x32xf32>, vector<32x128xf32>, vector<8x128xf32> -> vector<8x128xf32>
    %102 = arith.addf %98, %101 : vector<8x128xf32>
    %c0_72 = arith.constant 0 : index
    %c0_73 = arith.constant 0 : index
    %103 = vector.load %arg7[%c0_72, %c0_73] : memref<1x128xf32, #tpu.memory_space<vmem>>, vector<1x128xf32>
    %104 = vector.broadcast %103 : vector<1x128xf32> to vector<8x128xf32>
    %105 = arith.addf %102, %104 : vector<8x128xf32>
    %cst_74 = arith.constant 0.000000e+00 : f32
    %106 = vector.broadcast %cst_74 : f32 to vector<8x128xf32>
    %107 = arith.maximumf %105, %106 : vector<8x128xf32>
    %c0_75 = arith.constant 0 : index
    %c0_76 = arith.constant 0 : index
    %108 = vector.load %arg8[%c0_75, %c0_76] : memref<128x128xf32, #tpu.memory_space<vmem>>, vector<128x128xf32>
    %cst_77 = arith.constant dense<0.000000e+00> : vector<8x128xf32>
    %109 = tpu.matmul %107, %108, %cst_77 {dimension_numbers = #tpu.dot_dimension_numbers<[1], [0], [0], [1], [0, 0, 1, 1], [], []>} : vector<8x128xf32>, vector<128x128xf32>, vector<8x128xf32> -> vector<8x128xf32>
    %c0_78 = arith.constant 0 : index
    %c0_79 = arith.constant 0 : index
    %110 = vector.load %arg9[%c0_78, %c0_79] : memref<1x128xf32, #tpu.memory_space<vmem>>, vector<1x128xf32>
    %111 = vector.broadcast %110 : vector<1x128xf32> to vector<8x128xf32>
    %112 = arith.addf %109, %111 : vector<8x128xf32>
    %c0_80 = arith.constant 0 : index
    %c0_81 = arith.constant 0 : index
    %113 = vector.load %arg10[%c0_80, %c0_81] : memref<8x128xf32, #tpu.memory_space<vmem>>, vector<8x128xf32>
    tpu.vector_store %arg10[%c0_80, %c0_81], %112 {strides = array<i32>} : memref<8x128xf32, #tpu.memory_space<vmem>>, vector<8x128xf32>,
    return
  }
  func.func @transform_0(%arg0: i32) -> (i32, i32, i32) {
    %c0_i32 = arith.constant 0 : i32
    %c0_i32_0 = arith.constant 0 : i32
    %c0_i32_1 = arith.constant 0 : i32
    return %arg0, %c0_i32, %c0_i32_0 : i32, i32, i32
  }
  func.func @transform_1(%arg0: i32) -> (i32, i32, i32) {
    %c0_i32 = arith.constant 0 : i32
    %c0_i32_0 = arith.constant 0 : i32
    %c0_i32_1 = arith.constant 0 : i32
    return %arg0, %c0_i32, %c0_i32_0 : i32, i32, i32
  }
  func.func @transform_2(%arg0: i32) -> (i32, i32) {
    %c0_i32 = arith.constant 0 : i32
    %c0_i32_0 = arith.constant 0 : i32
    %c0_i32_1 = arith.constant 0 : i32
    return %c0_i32, %c0_i32_0 : i32, i32
  }
  func.func @transform_3(%arg0: i32) -> (i32, i32) {
    %c0_i32 = arith.constant 0 : i32
    %c0_i32_0 = arith.constant 0 : i32
    %c0_i32_1 = arith.constant 0 : i32
    return %c0_i32, %c0_i32_0 : i32, i32
  }
  func.func @transform_4(%arg0: i32) -> (i32, i32) {
    %c0_i32 = arith.constant 0 : i32
    %c0_i32_0 = arith.constant 0 : i32
    %c0_i32_1 = arith.constant 0 : i32
    return %c0_i32, %c0_i32_0 : i32, i32
  }
  func.func @transform_5(%arg0: i32) -> (i32, i32) {
    %c0_i32 = arith.constant 0 : i32
    %c0_i32_0 = arith.constant 0 : i32
    %c0_i32_1 = arith.constant 0 : i32
    return %c0_i32, %c0_i32_0 : i32, i32
  }
  func.func @transform_6(%arg0: i32) -> (i32, i32) {
    %c0_i32 = arith.constant 0 : i32
    %c0_i32_0 = arith.constant 0 : i32
    %c0_i32_1 = arith.constant 0 : i32
    return %c0_i32, %c0_i32_0 : i32, i32
  }
  func.func @transform_7(%arg0: i32) -> (i32, i32) {
    %c0_i32 = arith.constant 0 : i32
    %c0_i32_0 = arith.constant 0 : i32
    %c0_i32_1 = arith.constant 0 : i32
    return %c0_i32, %c0_i32_0 : i32, i32
  }
  func.func @transform_8(%arg0: i32) -> (i32, i32) {
    %c0_i32 = arith.constant 0 : i32
    %c0_i32_0 = arith.constant 0 : i32
    %c0_i32_1 = arith.constant 0 : i32
    return %c0_i32, %c0_i32_0 : i32, i32
  }
  func.func @transform_9(%arg0: i32) -> (i32, i32) {
    %c0_i32 = arith.constant 0 : i32
    %c0_i32_0 = arith.constant 0 : i32
    return %arg0, %c0_i32 : i32, i32
  }
}

</mosaic_0001>

<llo_original>
// kernel: tpu_custom_call.1
$region0: #{tpu_custom_call.1}
  #allocation0 [shape = 'u32[]', space=smem, size = 0x4, offset = 0x4, fixed_abs, tag = 'smem constant byte address 0x4 - core index']
  #allocation1 [shape = 'u32[144,128]{1,0:T(1,128)}', space=vmem, size = 0x12000, scoped, tag = 'internal scratch']
  #allocation2 [shape = 'f32[8,32]{1,0:T(8,128)}', space=vmem, size = 0x1000, scoped, tag = 'scratch operand']
  #allocation3 [shape = 'f32[8,32]{1,0:T(8,128)}', space=vmem, size = 0x1000, scoped, tag = 'scratch operand']
  %s0 = inlined_call_operand.hbm [shape: s32[1,1,8], index: 0, kind: input, shape index: {}]
  %s1 = inlined_call_operand.vmem [shape: s32[1,1,8], index: 1, kind: input, shape index: {}]
  %s2 = inlined_call_operand.hbm [shape: f32[16,32], index: 2, kind: input, shape index: {}]
  %s3 = inlined_call_operand.hbm [shape: f32[24,32], index: 3, kind: input, shape index: {}]
  %s4 = inlined_call_operand.hbm [shape: f32[32,128], index: 4, kind: input, shape index: {}]
  %s5 = inlined_call_operand.hbm [shape: f32[32,128], index: 5, kind: input, shape index: {}]
  %s6 = inlined_call_operand.vmem [shape: f32[1,128], index: 6, kind: input, shape index: {}]
  %s7 = inlined_call_operand.hbm [shape: f32[128,128], index: 7, kind: input, shape index: {}]
  %s8 = inlined_call_operand.vmem [shape: f32[1,128], index: 8, kind: input, shape index: {}]
  %s9 = inlined_call_operand.hbm [shape: f32[8,128], index: 9, kind: output, shape index: {}]
  %s10 = sld [smem:[#allocation0]]
  $region74: #{tpu_custom_call.1} parent=0
    _
  %s12 = ssub.s32 1, %s10
  %s13 = scalar_select 0, %s12, %s10
  $region1: #{tpu_custom_call.1} parent=0
    #allocation4 [shape = 'u8[512]{0}', space=smem, size = 0x200, scoped, tag = 'input window, operand 0, single buffered']
    #allocation5 [shape = 's32[1]{0}', space=sflag, size = 0x4, scoped, tag = 'scoped memory for tpu_custom_call.1']
    #allocation6 [shape = 's32[1]{0}', space=sflag, size = 0x4, scoped, tag = 'scoped memory for tpu_custom_call.1']
    #allocation7 [shape = 's32[1]{0}', space=sflag, size = 0x4, scoped, tag = 'scoped memory for tpu_custom_call.1']
    #allocation8 [shape = 's32[1]{0}', space=sflag, size = 0x4, scoped, tag = 'scoped memory for tpu_custom_call.1']
    #allocation9 [shape = 'u8[512]{0}', space=smem, size = 0x200, scoped, tag = 'input window, operand 1, single buffered']
    #allocation10 [shape = 'u8[8192]{0}', space=vmem, size = 0x2000, scoped, tag = 'input window, operand 2, single buffered']
    #allocation11 [shape = 'u8[12288]{0}', space=vmem, size = 0x3000, scoped, tag = 'input window, operand 3, single buffered']
    #allocation12 [shape = 's32[1]{0}', space=sflag, size = 0x4, scoped, tag = 'scoped memory for tpu_custom_call.1']
    #allocation13 [shape = 'u8[16384]{0}', space=vmem, size = 0x4000, scoped, tag = 'input window, operand 4, single buffered']
    #allocation14 [shape = 'u8[16384]{0}', space=vmem, size = 0x4000, scoped, tag = 'input window, operand 5, single buffered']
    #allocation15 [shape = 's32[1]{0}', space=sflag, size = 0x4, scoped, tag = 'scoped memory for tpu_custom_call.1']
    #allocation16 [shape = 'u8[65536]{0}', space=vmem, size = 0x10000, scoped, tag = 'input window, operand 7, single buffered']
    #allocation17 [shape = 'u8[4096]{0}', space=vmem, size = 0x1000, scoped, tag = 'output window, operand 0, single buffered']
    %14 = vsyncpa [#allocation7], 0
    %15 = vsyncpa [#allocation8], 0
    %16 = vsyncpa [#allocation5], 0
    %17 = vsyncpa [#allocation12], 0
    %18 = vsyncpa [#allocation15], 0
    %19 = vsyncpa [#allocation6], 0
    // Predicated region
    $region2: #{tpu_custom_call.1} parent=1 // pred_check
      _
    $region3: #{tpu_custom_call.1} parent=1 // pred_check_branch
      %21 = sbr.rel (0) target = $region5
    $region4: #{tpu_custom_call.1} parent=1 // pred_region
      %s23 = ssub.s32 16, 16
      %24 = vsyncadd [#allocation7], %s23
      %27 = dma.hbm_to_smem %s0, 16, [#allocation4], [#allocation7]
    $region5: #{tpu_custom_call.1} parent=1 // pred_fallthru
      _
    // Predicated region
    $region6: #{tpu_custom_call.1} parent=1 // pred_check
      _
    $region7: #{tpu_custom_call.1} parent=1 // pred_check_branch
      %29 = sbr.rel (0) target = $region9
    $region8: #{tpu_custom_call.1} parent=1 // pred_region
      %s31 = ssub.s32 16, 16
      %32 = vsyncadd [#allocation8], %s31
      %s34 = sshll.u32 %s1, 4
      %s35 = int_to_ptr.vmem [resolvable:$true] %s34
      %37 = dma.vmem_to_smem %s35, 16, [#allocation9], [#allocation8]
    $region9: #{tpu_custom_call.1} parent=1 // pred_fallthru
      _
    // Predicated region
    $region10: #{tpu_custom_call.1} parent=1 // pred_check
      _
    $region11: #{tpu_custom_call.1} parent=1 // pred_check_branch
      %39 = sbr.rel (0) target = $region13
    $region12: #{tpu_custom_call.1} parent=1 // pred_region
      %s41 = ssub.s32 256, 256
      %42 = vsyncadd [#allocation5], %s41
      %s43 = sshll.u32 [#allocation10], 4
      %s44 = int_to_ptr.vmem [resolvable:$true] %s43
      %49 = dma.hbm_to_vmem [thread:$0]  %s2, 256, %s44, [#allocation5], 128, 128, 8
    $region13: #{tpu_custom_call.1} parent=1 // pred_fallthru
      _
    // Predicated region
    $region14: #{tpu_custom_call.1} parent=1 // pred_check
      _
    $region15: #{tpu_custom_call.1} parent=1 // pred_check_branch
      %51 = sbr.rel (0) target = $region17
    $region16: #{tpu_custom_call.1} parent=1 // pred_region
      %s53 = ssub.s32 384, 384
      %54 = vsyncadd [#allocation12], %s53
      %s55 = sshll.u32 [#allocation11], 4
      %s56 = int_to_ptr.vmem [resolvable:$true] %s55
      %61 = dma.hbm_to_vmem [thread:$0]  %s3, 384, %s56, [#allocation12], 128, 128, 8
    $region17: #{tpu_custom_call.1} parent=1 // pred_fallthru
      _
    // Predicated region
    $region18: #{tpu_custom_call.1} parent=1 // pred_check
      _
    $region19: #{tpu_custom_call.1} parent=1 // pred_check_branch
      %63 = sbr.rel (0) target = $region21
    $region20: #{tpu_custom_call.1} parent=1 // pred_region
      %s65 = ssub.s32 512, 512
      %66 = vsyncadd [#allocation12], %s65
      %s67 = sshll.u32 [#allocation13], 4
      %s68 = int_to_ptr.vmem [resolvable:$true] %s67
      %73 = dma.hbm_to_vmem [thread:$0]  %s4, 512, %s68, [#allocation12], 128, 128, 8
    $region21: #{tpu_custom_call.1} parent=1 // pred_fallthru
      _
    // Predicated region
    $region22: #{tpu_custom_call.1} parent=1 // pred_check
      _
    $region23: #{tpu_custom_call.1} parent=1 // pred_check_branch
      %75 = sbr.rel (0) target = $region25
    $region24: #{tpu_custom_call.1} parent=1 // pred_region
      %s77 = ssub.s32 512, 512
      %78 = vsyncadd [#allocation15], %s77
      %s79 = sshll.u32 [#allocation14], 4
      %s80 = int_to_ptr.vmem [resolvable:$true] %s79
      %85 = dma.hbm_to_vmem [thread:$0]  %s5, 512, %s80, [#allocation15], 128, 128, 8
    $region25: #{tpu_custom_call.1} parent=1 // pred_fallthru
      _
    // Predicated region
    $region26: #{tpu_custom_call.1} parent=1 // pred_check
      _
    $region27: #{tpu_custom_call.1} parent=1 // pred_check_branch
      %87 = sbr.rel (0) target = $region29
    $region28: #{tpu_custom_call.1} parent=1 // pred_region
      _
    $region29: #{tpu_custom_call.1} parent=1 // pred_fallthru
      _
    // Predicated region
    $region30: #{tpu_custom_call.1} parent=1 // pred_check
      _
    $region31: #{tpu_custom_call.1} parent=1 // pred_check_branch
      %89 = sbr.rel (0) target = $region33
    $region32: #{tpu_custom_call.1} parent=1 // pred_region
      %s91 = ssub.s32 2048, 2048
      %92 = vsyncadd [#allocation15], %s91
      %s93 = sshll.u32 [#allocation16], 4
      %s94 = int_to_ptr.vmem [resolvable:$true] %s93
      %99 = dma.hbm_to_vmem [thread:$0]  %s7, 2048, %s94, [#allocation15], 128, 128, 8
    $region33: #{tpu_custom_call.1} parent=1 // pred_fallthru
      _
    // Predicated region
    $region34: #{tpu_custom_call.1} parent=1 // pred_check
      _
    $region35: #{tpu_custom_call.1} parent=1 // pred_check_branch
      %101 = sbr.rel (0) target = $region37
    $region36: #{tpu_custom_call.1} parent=1 // pred_region
      _
    $region37: #{tpu_custom_call.1} parent=1 // pred_fallthru
      _
    // Predicated region
    $region38: #{tpu_custom_call.1} parent=1 // pred_check
      _
    $region39: #{tpu_custom_call.1} parent=1 // pred_check_branch
      %103 = sbr.rel (0) target = $region41
    $region40: #{tpu_custom_call.1} parent=1 // pred_region
      %104 = dma.done [#allocation7], 16
    $region41: #{tpu_custom_call.1} parent=1 // pred_fallthru
      _
    // Predicated region
    $region42: #{tpu_custom_call.1} parent=1 // pred_check
      _
    $region43: #{tpu_custom_call.1} parent=1 // pred_check_branch
      %106 = sbr.rel (0) target = $region45
    $region44: #{tpu_custom_call.1} parent=1 // pred_region
      %107 = dma.done [#allocation8], 16
    $region45: #{tpu_custom_call.1} parent=1 // pred_fallthru
      _
    // Predicated region
    $region46: #{tpu_custom_call.1} parent=1 // pred_check
      _
    $region47: #{tpu_custom_call.1} parent=1 // pred_check_branch
      %109 = sbr.rel (0) target = $region49
    $region48: #{tpu_custom_call.1} parent=1 // pred_region
      %110 = dma.done [#allocation5], 256
    $region49: #{tpu_custom_call.1} parent=1 // pred_fallthru
      _
    // Predicated region
    $region50: #{tpu_custom_call.1} parent=1 // pred_check
      _
    $region51: #{tpu_custom_call.1} parent=1 // pred_check_branch
      %112 = sbr.rel (0) target = $region53
    $region52: #{tpu_custom_call.1} parent=1 // pred_region
      %113 = dma.done [#allocation12], 384
    $region53: #{tpu_custom_call.1} parent=1 // pred_fallthru
      _
    // Predicated region
    $region54: #{tpu_custom_call.1} parent=1 // pred_check
      _
    $region55: #{tpu_custom_call.1} parent=1 // pred_check_branch
      %115 = sbr.rel (0) target = $region57
    $region56: #{tpu_custom_call.1} parent=1 // pred_region
      %116 = dma.done [#allocation12], 512
    $region57: #{tpu_custom_call.1} parent=1 // pred_fallthru
      _
    // Predicated region
    $region58: #{tpu_custom_call.1} parent=1 // pred_check
      _
    $region59: #{tpu_custom_call.1} parent=1 // pred_check_branch
      %118 = sbr.rel (0) target = $region61
    $region60: #{tpu_custom_call.1} parent=1 // pred_region
      %119 = dma.done [#allocation15], 512
    $region61: #{tpu_custom_call.1} parent=1 // pred_fallthru
      _
    // Predicated region
    $region62: #{tpu_custom_call.1} parent=1 // pred_check
      _
    $region63: #{tpu_custom_call.1} parent=1 // pred_check_branch
      %121 = sbr.rel (0) target = $region65
    $region64: #{tpu_custom_call.1} parent=1 // pred_region
      %122 = dma.done [#allocation15], 2048
    $region65: #{tpu_custom_call.1} parent=1 // pred_fallthru
      _
    %123 = sfence
    %s124 = sld [smem:[#allocation4]]
    %s125 = sld [smem:[#allocation9]]
    %s126 = scalar_lea.vmem [#allocation10], %s124
    %v127 = vld [vmem:[%s126] sm:$0x1]
    %vm128 = vcmask 253952
    %129 = vst.msk [vmem:[#allocation2] sm:$0x1] %vm128, %v127
    %s130 = scalar_lea.vmem [#allocation11], %s125
    %v131 = vld [vmem:[%s130] sm:$0x1]
    %132 = vst.msk [vmem:[#allocation3] sm:$0x1] %vm128, %v131
    %s133 = sld [smem:[#allocation4 + $0x1]]
    %s134 = sld [smem:[#allocation9 + $0x1]]
    %s135 = scalar_lea.vmem [#allocation10], %s133
    %v136 = vld [vmem:[%s135] sm:$0x1]
    %137 = vst.msk [vmem:[#allocation2 + $0x1] sm:$0x1] %vm128, %v136
    %s138 = scalar_lea.vmem [#allocation11], %s134
    %v139 = vld [vmem:[%s138] sm:$0x1]
    %140 = vst.msk [vmem:[#allocation3 + $0x1] sm:$0x1] %vm128, %v139
    %s141 = sld [smem:[#allocation4 + $0x2]]
    %s142 = sld [smem:[#allocation9 + $0x2]]
    %s143 = scalar_lea.vmem [#allocation10], %s141
    %v144 = vld [vmem:[%s143] sm:$0x1]
    %145 = vst.msk [vmem:[#allocation2 + $0x2] sm:$0x1] %vm128, %v144
    %s146 = scalar_lea.vmem [#allocation11], %s142
    %v147 = vld [vmem:[%s146] sm:$0x1]
    %148 = vst.msk [vmem:[#allocation3 + $0x2] sm:$0x1] %vm128, %v147
    %s149 = sld [smem:[#allocation4 + $0x3]]
    %s150 = sld [smem:[#allocation9 + $0x3]]
    %s151 = scalar_lea.vmem [#allocation10], %s149
    %v152 = vld [vmem:[%s151] sm:$0x1]
    %153 = vst.msk [vmem:[#allocation2 + $0x3] sm:$0x1] %vm128, %v152
    %s154 = scalar_lea.vmem [#allocation11], %s150
    %v155 = vld [vmem:[%s154] sm:$0x1]
    %156 = vst.msk [vmem:[#allocation3 + $0x3] sm:$0x1] %vm128, %v155
    %s157 = sld [smem:[#allocation4 + $0x4]]
    %s158 = sld [smem:[#allocation9 + $0x4]]
    %s159 = scalar_lea.vmem [#allocation10], %s157
    %v160 = vld [vmem:[%s159] sm:$0x1]
    %161 = vst.msk [vmem:[#allocation2 + $0x4] sm:$0x1] %vm128, %v160
    %s162 = scalar_lea.vmem [#allocation11], %s158
    %v163 = vld [vmem:[%s162] sm:$0x1]
    %164 = vst.msk [vmem:[#allocation3 + $0x4] sm:$0x1] %vm128, %v163
    %s165 = sld [smem:[#allocation4 + $0x5]]
    %s166 = sld [smem:[#allocation9 + $0x5]]
    %s167 = scalar_lea.vmem [#allocation10], %s165
    %v168 = vld [vmem:[%s167] sm:$0x1]
    %169 = vst.msk [vmem:[#allocation2 + $0x5] sm:$0x1] %vm128, %v168
    %s170 = scalar_lea.vmem [#allocation11], %s166
    %v171 = vld [vmem:[%s170] sm:$0x1]
    %172 = vst.msk [vmem:[#allocation3 + $0x5] sm:$0x1] %vm128, %v171
    %s173 = sld [smem:[#allocation4 + $0x6]]
    %s174 = sld [smem:[#allocation9 + $0x6]]
    %s175 = scalar_lea.vmem [#allocation10], %s173
    %v176 = vld [vmem:[%s175] sm:$0x1]
    %177 = vst.msk [vmem:[#allocation2 + $0x6] sm:$0x1] %vm128, %v176
    %s178 = scalar_lea.vmem [#allocation11], %s174
    %v179 = vld [vmem:[%s178] sm:$0x1]
    %180 = vst.msk [vmem:[#allocation3 + $0x6] sm:$0x1] %vm128, %v179
    %s181 = sld [smem:[#allocation4 + $0x7]]
    %s182 = sld [smem:[#allocation9 + $0x7]]
    %s183 = scalar_lea.vmem [#allocation10], %s181
    %v184 = vld [vmem:[%s183] sm:$0x1]
    %185 = vst.msk [vmem:[#allocation2 + $0x7] sm:$0x1] %vm128, %v184
    %s186 = scalar_lea.vmem [#allocation11], %s182
    %v187 = vld [vmem:[%s186] sm:$0x1]
    %188 = vst.msk [vmem:[#allocation3 + $0x7] sm:$0x1] %vm128, %v187
    %v189 = vld [vmem:[#allocation2] sm:$0xff]
    %v190 = vld [vmem:[#allocation13] sm:$0xff]
    %v191 = vld [vmem:[#allocation13 + $0x8] sm:$0xff]
    %v192 = vld [vmem:[#allocation13 + $0x10] sm:$0xff]
    %v193 = vld [vmem:[#allocation13 + $0x18] sm:$0xff]
    %v194 = vld [vmem:[#allocation3] sm:$0xff]
    %v195 = vld [vmem:[#allocation14] sm:$0xff]
    %v196 = vld [vmem:[#allocation14 + $0x8] sm:$0xff]
    %v197 = vld [vmem:[#allocation14 + $0x10] sm:$0xff]
    %v198 = vld [vmem:[#allocation14 + $0x18] sm:$0xff]
    %vm199 = vcmask 261120
    %v201 = vsel %vm199, %v194, 0
    %203 = vmatprep.subr.mxu0 0.0
    %204 = vmatpush1.msra.mxu0 %v195
    %205 = vmatprep.subr.mxu0 0.0
    %206 = vmatpush1.msra.mxu0 %v196
    %207 = vmatprep.subr.mxu0 0.0
    %208 = vmatpush1.msra.mxu0 %v197
    %209 = vmatprep.subr.mxu0 0.0
    %210 = vmatpush1.msra.mxu0 %v198
    %211 = vmatprep.subr.mxu0 0.0
    %212 = vmatpush1.msra.mxu0 0.0
    %213 = vmatprep.subr.mxu0 0.0
    %214 = vmatpush1.msra.mxu0 0.0
    %215 = vmatprep.subr.mxu0 0.0
    %216 = vmatpush1.msra.mxu0 0.0
    %217 = vmatprep.subr.mxu0 0.0
    %218 = vmatpush1.msra.mxu0 0.0
    %219 = vmatprep.subr.mxu0 0.0
    %220 = vmatpush1.msra.mxu0 0.0
    %221 = vmatprep.subr.mxu0 0.0
    %222 = vmatpush1.msra.mxu0 0.0
    %223 = vmatprep.subr.mxu0 0.0
    %224 = vmatpush1.msra.mxu0 0.0
    %225 = vmatprep.subr.mxu0 0.0
    %226 = vmatpush1.msra.mxu0 0.0
    %227 = vmatprep.subr.mxu0 0.0
    %228 = vmatpush1.msra.mxu0 0.0
    %229 = vmatprep.subr.mxu0 0.0
    %230 = vmatpush1.msra.mxu0 0.0
    %231 = vmatprep.subr.mxu0 0.0
    %232 = vmatpush1.msra.mxu0 0.0
    %233 = vmatprep.subr.mxu0 0.0
    %234 = vmatpush1.msra.mxu0 0.0
    %235 = vmatprep.subr.mxu0 0.0
    %236 = vmatpush1.msra.mxu0 0.0
    %237 = vmatprep.subr.mxu0 0.0
    %238 = vmatpush1.msra.mxu0 0.0
    %239 = vmatprep.subr.mxu0 0.0
    %240 = vmatpush1.msra.mxu0 0.0
    %241 = vmatprep.subr.mxu0 0.0
    %242 = vmatpush1.msra.mxu0 0.0
    %243 = vmatprep.subr.mxu0 0.0
    %244 = vmatpush1.msra.mxu0 0.0
    %245 = vmatprep.subr.mxu0 0.0
    %246 = vmatpush1.msra.mxu0 0.0
    %247 = vmatprep.subr.mxu0 0.0
    %248 = vmatpush1.msra.mxu0 0.0
    %249 = vmatprep.subr.mxu0 0.0
    %250 = vmatpush1.msra.mxu0 0.0
    %251 = vmatprep.subr.mxu0 0.0
    %252 = vmatpush1.msra.mxu0 0.0
    %253 = vmatprep.subr.mxu0 0.0
    %254 = vmatpush1.msra.mxu0 0.0
    %255 = vmatprep.subr.mxu0 0.0
    %256 = vmatpush1.msra.mxu0 0.0
    %257 = vmatprep.subr.mxu0 0.0
    %258 = vmatpush1.msra.mxu0 0.0
    %259 = vmatprep.subr.mxu0 0.0
    %260 = vmatpush1.msra.mxu0 0.0
    %261 = vmatprep.subr.mxu0 0.0
    %262 = vmatpush1.msra.mxu0 0.0
    %263 = vmatprep.subr.mxu0 0.0
    %264 = vmatpush1.msra.mxu0 0.0
    %265 = vmatprep.subr.mxu0 0.0
    %266 = vmatpush1.msra.mxu0 0.0
    %267 = vmatprep.mubr.f32.mxu0 0.0
    %268 = vmatmul.mubr.f32.gmra.mrb[0].mxu0 %v201
    %v269 = vpop.f32.mrb[0].mxu0
    %v270 = vadd.f32 0.0, %v269
    %v271 = vpop.f32.mrb[0].mxu0
    %272 = vdwg.mxu0
    %v274 = vsel %vm199, %v189, 0
    %276 = vmatprep.subr.mxu0 0.0
    %277 = vmatpush1.msra.mxu0 %v190
    %278 = vmatprep.subr.mxu0 0.0
    %279 = vmatpush1.msra.mxu0 %v191
    %280 = vmatprep.subr.mxu0 0.0
    %281 = vmatpush1.msra.mxu0 %v192
    %282 = vmatprep.subr.mxu0 0.0
    %283 = vmatpush1.msra.mxu0 %v193
    %284 = vmatprep.subr.mxu0 0.0
    %285 = vmatpush1.msra.mxu0 0.0
    %286 = vmatprep.subr.mxu0 0.0
    %287 = vmatpush1.msra.mxu0 0.0
    %288 = vmatprep.subr.mxu0 0.0
    %289 = vmatpush1.msra.mxu0 0.0
    %290 = vmatprep.subr.mxu0 0.0
    %291 = vmatpush1.msra.mxu0 0.0
    %292 = vmatprep.subr.mxu0 0.0
    %293 = vmatpush1.msra.mxu0 0.0
    %294 = vmatprep.subr.mxu0 0.0
    %295 = vmatpush1.msra.mxu0 0.0
    %296 = vmatprep.subr.mxu0 0.0
    %297 = vmatpush1.msra.mxu0 0.0
    %298 = vmatprep.subr.mxu0 0.0
    %299 = vmatpush1.msra.mxu0 0.0
    %300 = vmatprep.subr.mxu0 0.0
    %301 = vmatpush1.msra.mxu0 0.0
    %302 = vmatprep.subr.mxu0 0.0
    %303 = vmatpush1.msra.mxu0 0.0
    %304 = vmatprep.subr.mxu0 0.0
    %305 = vmatpush1.msra.mxu0 0.0
    %306 = vmatprep.subr.mxu0 0.0
    %307 = vmatpush1.msra.mxu0 0.0
    %308 = vmatprep.subr.mxu0 0.0
    %309 = vmatpush1.msra.mxu0 0.0
    %310 = vmatprep.subr.mxu0 0.0
    %311 = vmatpush1.msra.mxu0 0.0
    %312 = vmatprep.subr.mxu0 0.0
    %313 = vmatpush1.msra.mxu0 0.0
    %314 = vmatprep.subr.mxu0 0.0
    %315 = vmatpush1.msra.mxu0 0.0
    %316 = vmatprep.subr.mxu0 0.0
    %317 = vmatpush1.msra.mxu0 0.0
    %318 = vmatprep.subr.mxu0 0.0
    %319 = vmatpush1.msra.mxu0 0.0
    %320 = vmatprep.subr.mxu0 0.0
    %321 = vmatpush1.msra.mxu0 0.0
    %322 = vmatprep.subr.mxu0 0.0
    %323 = vmatpush1.msra.mxu0 0.0
    %324 = vmatprep.subr.mxu0 0.0
    %325 = vmatpush1.msra.mxu0 0.0
    %326 = vmatprep.subr.mxu0 0.0
    %327 = vmatpush1.msra.mxu0 0.0
    %328 = vmatprep.subr.mxu0 0.0
    %329 = vmatpush1.msra.mxu0 0.0
    %330 = vmatprep.subr.mxu0 0.0
    %331 = vmatpush1.msra.mxu0 0.0
    %332 = vmatprep.subr.mxu0 0.0
    %333 = vmatpush1.msra.mxu0 0.0
    %334 = vmatprep.subr.mxu0 0.0
    %335 = vmatpush1.msra.mxu0 0.0
    %336 = vmatprep.subr.mxu0 0.0
    %337 = vmatpush1.msra.mxu0 0.0
    %338 = vmatprep.subr.mxu0 0.0
    %339 = vmatpush1.msra.mxu0 0.0
    %340 = vmatprep.mubr.f32.mxu0 0.0
    %341 = vmatmul.mubr.f32.gmra.mrb[0].mxu0 %v274
    %v342 = vpop.f32.mrb[0].mxu0
    %v343 = vadd.f32 %v270, %v342
    %v344 = vpop.f32.mrb[0].mxu0
    %345 = vdwg.mxu0
    %v346 = vld [vmem:[%s6] sm:$0x1]
    %v348 = vlaneseq
    %v349 = vshrl.u32 %v348, 7
    %v350 = vsub.s32 0, %v349
    %v351 = vrot.slane %v346, %v350
    %v353 = vadd.f32 %v343, %v351
    %v354 = vmax.f32 %v353, 0.0
    %v355 = vld [vmem:[#allocation16] sm:$0xff]
    %v356 = vld [vmem:[#allocation16 + $0x8] sm:$0xff]
    %v357 = vld [vmem:[#allocation16 + $0x10] sm:$0xff]
    %v358 = vld [vmem:[#allocation16 + $0x18] sm:$0xff]
    %v359 = vld [vmem:[#allocation16 + $0x20] sm:$0xff]
    %v360 = vld [vmem:[#allocation16 + $0x28] sm:$0xff]
    %v361 = vld [vmem:[#allocation16 + $0x30] sm:$0xff]
    %v362 = vld [vmem:[#allocation16 + $0x38] sm:$0xff]
    %v363 = vld [vmem:[#allocation16 + $0x40] sm:$0xff]
    %v364 = vld [vmem:[#allocation16 + $0x48] sm:$0xff]
    %v365 = vld [vmem:[#allocation16 + $0x50] sm:$0xff]
    %v366 = vld [vmem:[#allocation16 + $0x58] sm:$0xff]
    %v367 = vld [vmem:[#allocation16 + $0x60] sm:$0xff]
    %v368 = vld [vmem:[#allocation16 + $0x68] sm:$0xff]
    %v369 = vld [vmem:[#allocation16 + $0x70] sm:$0xff]
    %v370 = vld [vmem:[#allocation16 + $0x78] sm:$0xff]
    %v371 = vld [vmem:[%s8] sm:$0x1]
    %v373 = vlaneseq
    %v374 = vshrl.u32 %v373, 7
    %v375 = vsub.s32 0, %v374
    %v376 = vrot.slane %v371, %v375
    %378 = vmatprep.subr.mxu0 0.0
    %379 = vmatpush1.msra.mxu0 %v355
    %380 = vmatprep.subr.mxu0 0.0
    %381 = vmatpush1.msra.mxu0 %v356
    %382 = vmatprep.subr.mxu0 0.0
    %383 = vmatpush1.msra.mxu0 %v357
    %384 = vmatprep.subr.mxu0 0.0
    %385 = vmatpush1.msra.mxu0 %v358
    %386 = vmatprep.subr.mxu0 0.0
    %387 = vmatpush1.msra.mxu0 %v359
    %388 = vmatprep.subr.mxu0 0.0
    %389 = vmatpush1.msra.mxu0 %v360
    %390 = vmatprep.subr.mxu0 0.0
    %391 = vmatpush1.msra.mxu0 %v361
    %392 = vmatprep.subr.mxu0 0.0
    %393 = vmatpush1.msra.mxu0 %v362
    %394 = vmatprep.subr.mxu0 0.0
    %395 = vmatpush1.msra.mxu0 %v363
    %396 = vmatprep.subr.mxu0 0.0
    %397 = vmatpush1.msra.mxu0 %v364
    %398 = vmatprep.subr.mxu0 0.0
    %399 = vmatpush1.msra.mxu0 %v365
    %400 = vmatprep.subr.mxu0 0.0
    %401 = vmatpush1.msra.mxu0 %v366
    %402 = vmatprep.subr.mxu0 0.0
    %403 = vmatpush1.msra.mxu0 %v367
    %404 = vmatprep.subr.mxu0 0.0
    %405 = vmatpush1.msra.mxu0 %v368
    %406 = vmatprep.subr.mxu0 0.0
    %407 = vmatpush1.msra.mxu0 %v369
    %408 = vmatprep.subr.mxu0 0.0
    %409 = vmatpush1.msra.mxu0 %v370
    %410 = vmatprep.subr.mxu0 0.0
    %411 = vmatpush1.msra.mxu0 0.0
    %412 = vmatprep.subr.mxu0 0.0
    %413 = vmatpush1.msra.mxu0 0.0
    %414 = vmatprep.subr.mxu0 0.0
    %415 = vmatpush1.msra.mxu0 0.0
    %416 = vmatprep.subr.mxu0 0.0
    %417 = vmatpush1.msra.mxu0 0.0
    %418 = vmatprep.subr.mxu0 0.0
    %419 = vmatpush1.msra.mxu0 0.0
    %420 = vmatprep.subr.mxu0 0.0
    %421 = vmatpush1.msra.mxu0 0.0
    %422 = vmatprep.subr.mxu0 0.0
    %423 = vmatpush1.msra.mxu0 0.0
    %424 = vmatprep.subr.mxu0 0.0
    %425 = vmatpush1.msra.mxu0 0.0
    %426 = vmatprep.subr.mxu0 0.0
    %427 = vmatpush1.msra.mxu0 0.0
    %428 = vmatprep.subr.mxu0 0.0
    %429 = vmatpush1.msra.mxu0 0.0
    %430 = vmatprep.subr.mxu0 0.0
    %431 = vmatpush1.msra.mxu0 0.0
    %432 = vmatprep.subr.mxu0 0.0
    %433 = vmatpush1.msra.mxu0 0.0
    %434 = vmatprep.subr.mxu0 0.0
    %435 = vmatpush1.msra.mxu0 0.0
    %436 = vmatprep.subr.mxu0 0.0
    %437 = vmatpush1.msra.mxu0 0.0
    %438 = vmatprep.subr.mxu0 0.0
    %439 = vmatpush1.msra.mxu0 0.0
    %440 = vmatprep.subr.mxu0 0.0
    %441 = vmatpush1.msra.mxu0 0.0
    %442 = vmatprep.mubr.f32.mxu0 0.0
    %443 = vmatmul.mubr.f32.gmra.mrb[0].mxu0 %v354
    %v444 = vpop.f32.mrb[0].mxu0
    %v445 = vadd.f32 %v376, %v444
    %v446 = vpop.f32.mrb[0].mxu0
    %447 = vdwg.mxu0
    %448 = vst [vmem:[#allocation17] sm:$0xff] %v445
    // Predicated region
    $region66: #{tpu_custom_call.1} parent=1 // pred_check
      _
    $region67: #{tpu_custom_call.1} parent=1 // pred_check_branch
      %450 = sbr.rel (0) target = $region69
    $region68: #{tpu_custom_call.1} parent=1 // pred_region
      %s452 = ssub.s32 128, 128
      %453 = vsyncadd [#allocation6], %s452
      %s455 = sshll.u32 [#allocation17], 4
      %s456 = int_to_ptr.vmem [resolvable:$true] %s455
      %458 = dma.vmem_to_hbm [thread:$0]  %s456, 128, %s9, [#allocation6]
    $region69: #{tpu_custom_call.1} parent=1 // pred_fallthru
      _
    // Predicated region
    $region70: #{tpu_custom_call.1} parent=1 // pred_check
      _
    $region71: #{tpu_custom_call.1} parent=1 // pred_check_branch
      %460 = sbr.rel (0) target = $region73
    $region72: #{tpu_custom_call.1} parent=1 // pred_region
      %461 = dma.done [#allocation6], 128
    $region73: #{tpu_custom_call.1} parent=1 // pred_fallthru
      _
    %462 = vsyncpa [#allocation5], 1
    %463 = vsyncpa [#allocation12], 1
    %464 = vsyncpa [#allocation15], 1
    %465 = vsyncpa [#allocation6], 1
    %466 = vsyncpa [#allocation7], 1
    %467 = vsyncpa [#allocation8], 1

</llo_original>
